<compile_context>
chip_gen: v7x
topology: tpu7x:2x2x1
jax: 0.10.0
libtpu: 0.0.40
codegen_flags: <defaults>
</compile_context>

<pallas_src>
import functools

import jax
import jax.numpy as jnp
from jax.experimental import pallas as pl
from jax.experimental.pallas import tpu as pltpu

_CHOICE_TO_IDX = {"left": 0, "right": 1}


def _mm_kernel(choice_ref, w_ref, x_ref, o_ref):
    # choice_ref (scalar prefetch) is consumed by W's index_map; unused in the body.
    del choice_ref
    # One MXU matmul per (5, TN) output tile, f32 accumulation.
    o_ref[...] = jnp.dot(w_ref[...], x_ref[...], preferred_element_type=jnp.float32)


def _pick_tn(n, max_tn=512):
    """Largest lane-dense (multiple of 128) tile <= max_tn that divides N, else N."""
    if n % 128 == 0:
        tn = min(max_tn, n)
        while n % tn != 0:
            tn -= 128
        return tn
    return n


@jax.jit
def param_matmul(w_stacked, x, choice_idx):
    """out = w_stacked[choice_idx] @ x with a single Pallas kernel for both choices.

    w_stacked:  (C, M, K) stacked parameter matrices ('left' and 'right').
    x:          (K, N)
    choice_idx: (1,) int32 -- selects the parameter slice via scalar prefetch.
    """
    C, M, K = w_stacked.shape
    K2, N = x.shape
    assert K == K2, "inner dimensions must match"

    tn = _pick_tn(N)
    grid = (N // tn,)

    return pl.pallas_call(
        _mm_kernel,
        out_shape=jax.ShapeDtypeStruct((M, N), jnp.float32),
        grid_spec=pltpu.PrefetchScalarGridSpec(
            # choice_idx lands in SMEM before the grid runs and feeds W's index_map.
            num_scalar_prefetch=1,
            grid=grid,
            in_specs=[
                # W: the (M, K) slice picked by the prefetched choice; block index is
                # constant across the N grid => resident in VMEM, DMA'd once.
                pl.BlockSpec((None, M, K), lambda j, choice: (choice[0], 0, 0)),
                # x: lane-dense (K, TN) tiles marching along N.
                pl.BlockSpec((K, tn), lambda j, choice: (0, j)),
            ],
            out_specs=pl.BlockSpec((M, tn), lambda j, choice: (0, j)),
        ),
        compiler_params=pltpu.CompilerParams(
            # N-tiles are independent -> v7x megacore can shard them across its 2 TCs.
            dimension_semantics=("parallel",),
        ),
    )(choice_idx, w_stacked, x)


class MyModuleJAX:
    """JAX/Pallas equivalent of the PyTorch MyModule (ParameterDict of two 5x10 mats)."""

    def __init__(self, key):
        k_left, k_right = jax.random.split(key)
        self.params = {
            "left": jax.random.normal(k_left, (5, 10), dtype=jnp.float32),
            "right": jax.random.normal(k_right, (5, 10), dtype=jnp.float32),
        }
        # Pre-stack so one compiled kernel handles both choices.
        self.w_stacked = jnp.stack(
            [self.params["left"], self.params["right"]], axis=0
        )  # (2, 5, 10)

    def forward(self, x, choice):
        # String -> int lookup is host-side glue; weight selection + matmul run
        # inside the single Pallas kernel.
        idx = jnp.array([_CHOICE_TO_IDX[choice]], dtype=jnp.int32)
        return param_matmul(self.w_stacked, x, idx)


if __name__ == "__main__":
    key = jax.random.PRNGKey(0)
    k_params, k_x1, k_x2 = jax.random.split(key, 3)

    module = MyModuleJAX(k_params)

    # Lane-dense batch: x is (10, 1024) -> grid=(2,) of (5, 512) output tiles.
    x_big = jax.random.normal(k_x1, (10, 1024), dtype=jnp.float32)
    # Original tiny usage shape from the PyTorch spec: (10, 8) -> single full block.
    x_small = jax.random.normal(k_x2, (10, 8), dtype=jnp.float32)

    out_left = module.forward(x_big, "left")
    out_right = module.forward(x_big, "right")   # same compiled kernel, different scalar
    out_small = module.forward(x_small, "left")
    jax.block_until_ready((out_left, out_right, out_small))

    # Sanity check against plain JAX reference.
    ref_left = module.params["left"] @ x_big
    ref_right = module.params["right"] @ x_big
    ref_small = module.params["left"] @ x_small

    assert out_left.shape == (5, 1024) and out_right.shape == (5, 1024)
    assert out_small.shape == (5, 8)
    assert jnp.allclose(out_left, ref_left, atol=1e-5, rtol=1e-5)
    assert jnp.allclose(out_right, ref_right, atol=1e-5, rtol=1e-5)
    assert jnp.allclose(out_small, ref_small, atol=1e-5, rtol=1e-5)

    print("KERNEL_OK")
</pallas_src>

<mosaic_0001>
module attributes {stable_mosaic.version = 11 : i64} {
  func.func @_mm_kernel(%arg0: i32, %arg1: memref<1xi32, #tpu.memory_space<smem>>, %arg2: memref<1x5x10xf32, #tpu.memory_space<vmem>>, %arg3: memref<10x512xf32, #tpu.memory_space<vmem>>, %arg4: memref<5x512xf32, #tpu.memory_space<vmem>>) attributes {dimension_semantics = [#tpu.dimension_semantics<parallel>], iteration_bounds = array<i64: 2>, scalar_prefetch = 1 : i64, scratch_operands = 0 : i64, tpu.core_type = #tpu.core_type<tc>, window_params = [{transform_indices = @transform_0, window_bounds = array<i64: 1, 5, 10>}, {transform_indices = @transform_1, window_bounds = array<i64: 10, 512>}, {transform_indices = @transform_2, window_bounds = array<i64: 5, 512>}]} {
    %c0 = arith.constant 0 : index
    %c0_0 = arith.constant 0 : index
    %c0_1 = arith.constant 0 : index
    %0 = vector.load %arg2[%c0, %c0_0, %c0_1] : memref<1x5x10xf32, #tpu.memory_space<vmem>>, vector<1x5x10xf32>
    %1 = vector.shape_cast %0 : vector<1x5x10xf32> to vector<5x10xf32>
    %c0_2 = arith.constant 0 : index
    %c0_3 = arith.constant 0 : index
    %2 = vector.load %arg3[%c0_2, %c0_3] : memref<10x512xf32, #tpu.memory_space<vmem>>, vector<10x512xf32>
    %cst = arith.constant dense<0.000000e+00> : vector<5x512xf32>
    %3 = tpu.matmul %1, %2, %cst {dimension_numbers = #tpu.dot_dimension_numbers<[1], [0], [0], [1], [0, 0, 1, 1], [], []>} : vector<5x10xf32>, vector<10x512xf32>, vector<5x512xf32> -> vector<5x512xf32>
    %c0_4 = arith.constant 0 : index
    %c0_5 = arith.constant 0 : index
    %4 = vector.load %arg4[%c0_4, %c0_5] : memref<5x512xf32, #tpu.memory_space<vmem>>, vector<5x512xf32>
    tpu.vector_store %arg4[%c0_4, %c0_5], %3 {strides = array<i32>} : memref<5x512xf32, #tpu.memory_space<vmem>>, vector<5x512xf32>,
    return
  }
  func.func @transform_0(%arg0: i32, %arg1: memref<1xi32, #tpu.memory_space<smem>>) -> (i32, i32, i32) {
    %c0 = arith.constant 0 : index
    %0 = memref.load %arg1[%c0] : memref<1xi32, #tpu.memory_space<smem>>
    %c0_i32 = arith.constant 0 : i32
    %c0_i32_0 = arith.constant 0 : i32
    %c0_i32_1 = arith.constant 0 : i32
    return %0, %c0_i32, %c0_i32_0 : i32, i32, i32
  }
  func.func @transform_1(%arg0: i32, %arg1: memref<1xi32, #tpu.memory_space<smem>>) -> (i32, i32) {
    %c0_i32 = arith.constant 0 : i32
    %c0_i32_0 = arith.constant 0 : i32
    return %c0_i32, %arg0 : i32, i32
  }
  func.func @transform_2(%arg0: i32, %arg1: memref<1xi32, #tpu.memory_space<smem>>) -> (i32, i32) {
    %c0_i32 = arith.constant 0 : i32
    %c0_i32_0 = arith.constant 0 : i32
    return %c0_i32, %arg0 : i32, i32
  }
}

</mosaic_0001>

<llo_original>
// kernel: param_matmul.1
$region0: #{param_matmul.1}
  #allocation0 [shape = 'u32[]', space=smem, size = 0x4, offset = 0x4, fixed_abs, tag = 'smem constant byte address 0x4 - core index']
  #allocation1 [shape = 'u32[144,128]{1,0:T(1,128)}', space=vmem, size = 0x12000, scoped, tag = 'internal scratch']
  #allocation2 [shape = 's32[1]{0}', space=sflag, size = 0x4, scoped, tag = 'scoped memory for param_matmul.1']
  #allocation3 [shape = 's32[1]{0:T(128)S(6)}', space=smem, size = 0x200, scoped, tag = 'prefetched SMEM operand 0']
  %s0 = inlined_call_operand.<no memory space> [shape: s32[1], index: 0, kind: input, shape index: {}]
  %s1 = inlined_call_operand.vmem [shape: f32[2,5,10], index: 1, kind: input, shape index: {}]
  %s2 = inlined_call_operand.hbm [shape: f32[10,1024], index: 2, kind: input, shape index: {}]
  %s3 = inlined_call_operand.hbm [shape: f32[5,1024], index: 3, kind: output, shape index: {}]
  %s4 = sld [smem:[#allocation0]]
  $region45: #{param_matmul.1} parent=0
    _
  %s6 = ssub.s32 1, %s4
  %s7 = scalar_select 0, %s6, %s4
  %8 = sst [smem:[#allocation3]] %s0
  $region1: #{param_matmul.1} parent=0
    #allocation4 [shape = 'u8[65536]{0}', space=vmem, size = 0x10000, scoped, tag = 'input window, operand 2']
    #allocation5 [shape = 's32[2]{0}', space=sflag, size = 0x8, scoped, tag = 'scoped memory for param_matmul.1']
    #allocation6 [shape = 's32[2]{0}', space=sflag, size = 0x8, scoped, tag = 'scoped memory for param_matmul.1']
    #allocation7 [shape = 'u8[32768]{0}', space=vmem, size = 0x8000, scoped, tag = 'output window, operand 0']
    %9 = vsyncpa [#allocation5], 0
    %s10 = scalar_lea.sflag [#allocation5], 1
    %11 = vsyncpa %s10, 0
    %12 = vsyncpa [#allocation6], 0
    %s13 = scalar_lea.sflag [#allocation6], 1
    %14 = vsyncpa %s13, 0
    loop: start=0, step=1, limit=4
    $region2: #{param_matmul.1} parent=1 // loop_pre_header
      _
    $region3: #{param_matmul.1} parent=1 // loop_header
      %s16 = sphi 0, %s20
      %p17 = scmp.ge.s32.totalorder %s16, 4
      %s28 = sphi 0, %s30
      %s31 = sphi 0, %s28
      %s32 = sphi 0, %s31
      %s48 = sphi 0, %s32
      %s54 = sphi 0, %s56
      %s57 = sphi 0, %s54
      %s58 = sphi 0, %s57
      %s74 = sphi 0, %s58
      %s80 = sphi 0, %s82
      %s83 = sphi 0, %s80
      %s84 = sphi 0, %s83
      %s100 = sphi 0, %s84
    $region4: #{param_matmul.1} parent=1 // loop_header_branch
      %19 = sbr.rel (%p17) target = $region8
    $region5: #{param_matmul.1} parent=1 // loop_body
      %s21 = ssub.s32 %s16, 1
      %s22 = ssub.s32 %s16, 2
      %s23 = sadd.s32 %s16, 1
      %s24 = sld [smem:[#allocation3]]
      %s25 = sld [smem:[#allocation3]]
      %s26 = ssub.s32 %s24, %s25
      %p27 = scmp.eq.s32.totalorder %s26, 0
      %s29 = sadd.s32 %s28, 1
      %s30 = scalar_select %p27, %s28, %s29
      %p33 = pneg %p27
      %p34 = scmp.eq.s32.totalorder %s16, 1
      %p35 = por %p33, %p34
      %p36 = scmp.ne.s32.totalorder %s28, %s31
      %p37 = scmp.eq.s32.totalorder %s16, 0
      %p38 = por %p36, %p37
      %p39 = scmp.ne.s32.totalorder %s28, %s31
      %p40 = scmp.eq.s32.totalorder %s21, 1
      %p41 = por %p39, %p40
      %p42 = scmp.ne.s32.totalorder %s31, %s32
      %p43 = scmp.eq.s32.totalorder %s21, 0
      %p44 = por %p42, %p43
      %p45 = scmp.ne.s32.totalorder %s31, %s32
      %p46 = scmp.eq.s32.totalorder %s22, 1
      %p47 = por %p45, %p46
      %p49 = scmp.ne.s32.totalorder %s32, %s48
      %p50 = scmp.eq.s32.totalorder %s22, 0
      %p51 = por %p49, %p50
      %s52 = ssub.s32 %s16, %s23
      %p53 = scmp.eq.s32.totalorder %s52, 0
      %s55 = sadd.s32 %s54, 1
      %s56 = scalar_select %p53, %s54, %s55
      %p59 = pneg %p53
      %p60 = scmp.eq.s32.totalorder %s16, 1
      %p61 = por %p59, %p60
      %p62 = scmp.ne.s32.totalorder %s54, %s57
      %p63 = scmp.eq.s32.totalorder %s16, 0
      %p64 = por %p62, %p63
      %p65 = scmp.ne.s32.totalorder %s54, %s57
      %p66 = scmp.eq.s32.totalorder %s21, 1
      %p67 = por %p65, %p66
      %p68 = scmp.ne.s32.totalorder %s57, %s58
      %p69 = scmp.eq.s32.totalorder %s21, 0
      %p70 = por %p68, %p69
      %p71 = scmp.ne.s32.totalorder %s57, %s58
      %p72 = scmp.eq.s32.totalorder %s22, 1
      %p73 = por %p71, %p72
      %p75 = scmp.ne.s32.totalorder %s58, %s74
      %p76 = scmp.eq.s32.totalorder %s22, 0
      %p77 = por %p75, %p76
      %s78 = ssub.s32 %s16, %s23
      %p79 = scmp.eq.s32.totalorder %s78, 0
      %s81 = sadd.s32 %s80, 1
      %s82 = scalar_select %p79, %s80, %s81
      %p85 = pneg %p79
      %p86 = scmp.eq.s32.totalorder %s16, 1
      %p87 = por %p85, %p86
      %p88 = scmp.ne.s32.totalorder %s80, %s83
      %p89 = scmp.eq.s32.totalorder %s16, 0
      %p90 = por %p88, %p89
      %p91 = scmp.ne.s32.totalorder %s80, %s83
      %p92 = scmp.eq.s32.totalorder %s21, 1
      %p93 = por %p91, %p92
      %p94 = scmp.ne.s32.totalorder %s83, %s84
      %p95 = scmp.eq.s32.totalorder %s21, 0
      %p96 = por %p94, %p95
      %p97 = scmp.ne.s32.totalorder %s83, %s84
      %p98 = scmp.eq.s32.totalorder %s22, 1
      %p99 = por %p97, %p98
      %p101 = scmp.ne.s32.totalorder %s84, %s100
      %p102 = scmp.eq.s32.totalorder %s22, 0
      %p103 = por %p101, %p102
      %p104 = scmp.le.s32.totalorder 1, %s16
      %p105 = scmp.lt.s32.totalorder %s16, 3
      %p106 = pnand %p104, %p105
      %p107 = pneg %p106
      // Predicated region
      $region9: #{param_matmul.1} parent=5 // pred_check
        _
      $region10: #{param_matmul.1} parent=5 // pred_check_branch
        %109 = sbr.rel (%p106) target = $region12
      $region11: #{param_matmul.1} parent=5 // pred_region
        %s110 = ssub.s32 %s16, 1
        // Predicated region
        $region13: #{param_matmul.1} parent=11 // pred_check
          %p111 = pneg %p44
        $region14: #{param_matmul.1} parent=11 // pred_check_branch
          %113 = sbr.rel (%p111) target = $region16
        $region15: #{param_matmul.1} parent=11 // pred_region
          %s114 = sld [smem:[#allocation3]]
          %p115 = scmp.lt.s32.totalorder %s114, 1
          %s116 = scalar_select %p115, %s114, 1
          %s117 = smul.addr %s116, 8
          %s118 = scalar_lea.vmem %s1, %s117
          %s119 = sld [smem:[#allocation3]]
        $region16: #{param_matmul.1} parent=11 // pred_fallthru
          _
      $region12: #{param_matmul.1} parent=5 // pred_fallthru
        _
      %p120 = scmp.lt.s32.totalorder %s16, 2
      // Predicated region
      $region17: #{param_matmul.1} parent=5 // pred_check
        %p121 = pneg %p120
      $region18: #{param_matmul.1} parent=5 // pred_check_branch
        %123 = sbr.rel (%p121) target = $region20
      $region19: #{param_matmul.1} parent=5 // pred_region
        // Predicated region
        $region21: #{param_matmul.1} parent=19 // pred_check
          %p124 = pneg %p64
        $region22: #{param_matmul.1} parent=19 // pred_check_branch
          %126 = sbr.rel (%p124) target = $region24
        $region23: #{param_matmul.1} parent=19 // pred_region
          %s127 = sand.u32 %s54, 1
          %s128 = scalar_lea.sflag [#allocation5], %s127
          %s129 = sand.u32 %s54, 1
          %s130 = smul.addr %s129, 64
          %s131 = scalar_lea.vmem [#allocation4], %s130
          %s132 = smul.u32 4, %s16
          %s134 = ssub.s32 1024, 1024
          %135 = vsyncadd %s128, %s134
          %s136 = smul.addr %s132, 128
          %s137 = scalar_lea.hbm %s2, %s136
          %s138 = sshll.u32 %s131, 4
          %s139 = int_to_ptr.vmem [resolvable:$true] %s138
          %144 = dma.hbm_to_vmem [thread:$0]  %s137, 1024, %s139, %s128, 1024, 512, 32
        $region24: #{param_matmul.1} parent=19 // pred_fallthru
          _
      $region20: #{param_matmul.1} parent=5 // pred_fallthru
        _
      %p145 = scmp.le.s32.totalorder 1, %s16
      %p146 = scmp.lt.s32.totalorder %s16, 3
      %p147 = pnand %p145, %p146
      %p148 = pneg %p147
      // Predicated region
      $region25: #{param_matmul.1} parent=5 // pred_check
        _
      $region26: #{param_matmul.1} parent=5 // pred_check_branch
        %150 = sbr.rel (%p147) target = $region28
      $region27: #{param_matmul.1} parent=5 // pred_region
        %s151 = ssub.s32 %s16, 1
        %s152 = sand.u32 %s57, 1
        %s153 = scalar_lea.sflag [#allocation5], %s152
        %s154 = sand.u32 %s57, 1
        %s155 = smul.addr %s154, 64
        %s156 = scalar_lea.vmem [#allocation4], %s155
        // Predicated region
        $region29: #{param_matmul.1} parent=27 // pred_check
          %p157 = pneg %p70
        $region30: #{param_matmul.1} parent=27 // pred_check_branch
          %159 = sbr.rel (%p157) target = $region32
        $region31: #{param_matmul.1} parent=27 // pred_region
          %160 = dma.done %s153, 1024
        $region32: #{param_matmul.1} parent=27 // pred_fallthru
          _
        %s161 = sld [smem:[#allocation3]]
        %p162 = scmp.lt.s32.totalorder %s161, 1
        %s163 = scalar_select %p162, %s161, 1
        %s164 = smul.addr %s163, 8
        %s165 = scalar_lea.vmem %s1, %s164
        %p166 = pneg %p44
        %p167 = pneg %p41
        %s168 = sand.u32 %s57, 1
        %s169 = scalar_lea.sflag [#allocation5], %s168
        %s170 = sand.u32 %s57, 1
        %s171 = smul.addr %s170, 64
        %s172 = scalar_lea.vmem [#allocation4], %s171
        %p173 = pneg %p70
        %p174 = pneg %p67
        %p175 = pneg %p96
        %p176 = pneg %p93
        %s177 = sand.u32 %s83, 1
        %s178 = scalar_lea.sflag [#allocation6], %s177
        %s179 = sand.u32 %s83, 1
        %s180 = smul.addr %s179, 32
        %s181 = scalar_lea.vmem [#allocation7], %s180
        %s182 = sld [smem:[#allocation3]]
        %p183 = scmp.lt.s32.totalorder %s182, 1
        %s184 = scalar_select %p183, %s182, 1
        %s185 = smul.addr %s184, 8
        %s186 = scalar_lea.vmem %s1, %s185
        %s187 = sld [smem:[#allocation3]]
        %s188 = smul.u32 4, %s21
        %s189 = smul.u32 4, %s21
        %v190 = vld [vmem:[%s186] sm:$0x1f]
        %v191 = vld [vmem:[%s156] sm:$0xff]
        %v192 = vld [vmem:[%s156 + $0x8] sm:$0xff]
        %v193 = vld [vmem:[%s156 + $0x10] sm:$0xff]
        %v194 = vld [vmem:[%s156 + $0x18] sm:$0xff]
        %v195 = vld [vmem:[%s156 + $0x20] sm:$0x3]
        %v196 = vld [vmem:[%s156 + $0x28] sm:$0x3]
        %v197 = vld [vmem:[%s156 + $0x30] sm:$0x3]
        %v198 = vld [vmem:[%s156 + $0x38] sm:$0x3]
        %vm199 = vcmask 80896
        %v201 = vsel %vm199, %v190, 0
        %vm203 = vcmask 1041408
        %v205 = vsel %vm203, %v195, 0
        %v208 = vsel %vm203, %v196, 0
        %v211 = vsel %vm203, %v197, 0
        %v214 = vsel %vm203, %v198, 0
        %216 = vmatprep.subr.mxu0 %v192
        %217 = vmatpush1.msra.mxu0 %v191
        %218 = vmatprep.subr.mxu0 %v208
        %219 = vmatpush1.msra.mxu0 %v205
        %220 = vmatprep.subr.mxu0 0.0
        %221 = vmatpush1.msra.mxu0 0.0
        %222 = vmatprep.subr.mxu0 0.0
        %223 = vmatpush1.msra.mxu0 0.0
        %224 = vmatprep.subr.mxu0 0.0
        %225 = vmatpush1.msra.mxu0 0.0
        %226 = vmatprep.subr.mxu0 0.0
        %227 = vmatpush1.msra.mxu0 0.0
        %228 = vmatprep.subr.mxu0 0.0
        %229 = vmatpush1.msra.mxu0 0.0
        %230 = vmatprep.subr.mxu0 0.0
        %231 = vmatpush1.msra.mxu0 0.0
        %232 = vmatprep.subr.mxu0 0.0
        %233 = vmatpush1.msra.mxu0 0.0
        %234 = vmatprep.subr.mxu0 0.0
        %235 = vmatpush1.msra.mxu0 0.0
        %236 = vmatprep.subr.mxu0 0.0
        %237 = vmatpush1.msra.mxu0 0.0
        %238 = vmatprep.subr.mxu0 0.0
        %239 = vmatpush1.msra.mxu0 0.0
        %240 = vmatprep.subr.mxu0 0.0
        %241 = vmatpush1.msra.mxu0 0.0
        %242 = vmatprep.subr.mxu0 0.0
        %243 = vmatpush1.msra.mxu0 0.0
        %244 = vmatprep.subr.mxu0 0.0
        %245 = vmatpush1.msra.mxu0 0.0
        %246 = vmatprep.subr.mxu0 0.0
        %247 = vmatpush1.msra.mxu0 0.0
        %248 = vmatprep.subr.mxu0 0.0
        %249 = vmatpush1.msra.mxu0 0.0
        %250 = vmatprep.subr.mxu0 0.0
        %251 = vmatpush1.msra.mxu0 0.0
        %252 = vmatprep.subr.mxu0 0.0
        %253 = vmatpush1.msra.mxu0 0.0
        %254 = vmatprep.subr.mxu0 0.0
        %255 = vmatpush1.msra.mxu0 0.0
        %256 = vmatprep.subr.mxu0 0.0
        %257 = vmatpush1.msra.mxu0 0.0
        %258 = vmatprep.subr.mxu0 0.0
        %259 = vmatpush1.msra.mxu0 0.0
        %260 = vmatprep.subr.mxu0 0.0
        %261 = vmatpush1.msra.mxu0 0.0
        %262 = vmatprep.subr.mxu0 0.0
        %263 = vmatpush1.msra.mxu0 0.0
        %264 = vmatprep.subr.mxu0 0.0
        %265 = vmatpush1.msra.mxu0 0.0
        %266 = vmatprep.subr.mxu0 0.0
        %267 = vmatpush1.msra.mxu0 0.0
        %268 = vmatprep.subr.mxu0 0.0
        %269 = vmatpush1.msra.mxu0 0.0
        %270 = vmatprep.subr.mxu0 0.0
        %271 = vmatpush1.msra.mxu0 0.0
        %272 = vmatprep.subr.mxu0 0.0
        %273 = vmatpush1.msra.mxu0 0.0
        %274 = vmatprep.subr.mxu0 0.0
        %275 = vmatpush1.msra.mxu0 0.0
        %276 = vmatprep.subr.mxu0 0.0
        %277 = vmatpush1.msra.mxu0 0.0
        %278 = vmatprep.subr.mxu0 0.0
        %279 = vmatpush1.msra.mxu0 0.0
        %280 = vmatprep.mubr.f32.mxu0 0.0
        %281 = vmatmul.mubr.f32.gmra.mrb[0].mxu0 %v201
        %v282 = vpop.f32.mrb[0].mxu0
        %v283 = vadd.f32 0.0, %v282
        %v284 = vpop.f32.mrb[0].mxu0
        %v285 = vadd.f32 0.0, %v284
        %286 = vdwg.mxu0
        %287 = vmatprep.subr.mxu0 %v194
        %288 = vmatpush1.msra.mxu0 %v193
        %289 = vmatprep.subr.mxu0 %v214
        %290 = vmatpush1.msra.mxu0 %v211
        %291 = vmatprep.subr.mxu0 0.0
        %292 = vmatpush1.msra.mxu0 0.0
        %293 = vmatprep.subr.mxu0 0.0
        %294 = vmatpush1.msra.mxu0 0.0
        %295 = vmatprep.subr.mxu0 0.0
        %296 = vmatpush1.msra.mxu0 0.0
        %297 = vmatprep.subr.mxu0 0.0
        %298 = vmatpush1.msra.mxu0 0.0
        %299 = vmatprep.subr.mxu0 0.0
        %300 = vmatpush1.msra.mxu0 0.0
        %301 = vmatprep.subr.mxu0 0.0
        %302 = vmatpush1.msra.mxu0 0.0
        %303 = vmatprep.subr.mxu0 0.0
        %304 = vmatpush1.msra.mxu0 0.0
        %305 = vmatprep.subr.mxu0 0.0
        %306 = vmatpush1.msra.mxu0 0.0
        %307 = vmatprep.subr.mxu0 0.0
        %308 = vmatpush1.msra.mxu0 0.0
        %309 = vmatprep.subr.mxu0 0.0
        %310 = vmatpush1.msra.mxu0 0.0
        %311 = vmatprep.subr.mxu0 0.0
        %312 = vmatpush1.msra.mxu0 0.0
        %313 = vmatprep.subr.mxu0 0.0
        %314 = vmatpush1.msra.mxu0 0.0
        %315 = vmatprep.subr.mxu0 0.0
        %316 = vmatpush1.msra.mxu0 0.0
        %317 = vmatprep.subr.mxu0 0.0
        %318 = vmatpush1.msra.mxu0 0.0
        %319 = vmatprep.subr.mxu0 0.0
        %320 = vmatpush1.msra.mxu0 0.0
        %321 = vmatprep.subr.mxu0 0.0
        %322 = vmatpush1.msra.mxu0 0.0
        %323 = vmatprep.subr.mxu0 0.0
        %324 = vmatpush1.msra.mxu0 0.0
        %325 = vmatprep.subr.mxu0 0.0
        %326 = vmatpush1.msra.mxu0 0.0
        %327 = vmatprep.subr.mxu0 0.0
        %328 = vmatpush1.msra.mxu0 0.0
        %329 = vmatprep.subr.mxu0 0.0
        %330 = vmatpush1.msra.mxu0 0.0
        %331 = vmatprep.subr.mxu0 0.0
        %332 = vmatpush1.msra.mxu0 0.0
        %333 = vmatprep.subr.mxu0 0.0
        %334 = vmatpush1.msra.mxu0 0.0
        %335 = vmatprep.subr.mxu0 0.0
        %336 = vmatpush1.msra.mxu0 0.0
        %337 = vmatprep.subr.mxu0 0.0
        %338 = vmatpush1.msra.mxu0 0.0
        %339 = vmatprep.subr.mxu0 0.0
        %340 = vmatpush1.msra.mxu0 0.0
        %341 = vmatprep.subr.mxu0 0.0
        %342 = vmatpush1.msra.mxu0 0.0
        %343 = vmatprep.subr.mxu0 0.0
        %344 = vmatpush1.msra.mxu0 0.0
        %345 = vmatprep.subr.mxu0 0.0
        %346 = vmatpush1.msra.mxu0 0.0
        %347 = vmatprep.subr.mxu0 0.0
        %348 = vmatpush1.msra.mxu0 0.0
        %349 = vmatprep.subr.mxu0 0.0
        %350 = vmatpush1.msra.mxu0 0.0
        %351 = vmatprep.mubr.f32.mxu0 0.0
        %352 = vmatmul.mubr.f32.gmra.mrb[0].mxu0 %v201
        %v353 = vpop.f32.mrb[0].mxu0
        %v354 = vadd.f32 0.0, %v353
        %v355 = vpop.f32.mrb[0].mxu0
        %v356 = vadd.f32 0.0, %v355
        %357 = vdwg.mxu0
        %358 = vst [vmem:[%s181] sm:$0x1f] %v283
        %359 = vst [vmem:[%s181 + $0x8] sm:$0x1f] %v285
        %360 = vst [vmem:[%s181 + $0x10] sm:$0x1f] %v354
        %361 = vst [vmem:[%s181 + $0x18] sm:$0x1f] %v356
        %s362 = sand.u32 %s83, 1
        %s363 = scalar_lea.sflag [#allocation6], %s362
        %s364 = sand.u32 %s83, 1
        %s365 = smul.addr %s364, 32
        %s366 = scalar_lea.vmem [#allocation7], %s365
        // Predicated region
        $region33: #{param_matmul.1} parent=27 // pred_check
          %p367 = pneg %p93
        $region34: #{param_matmul.1} parent=27 // pred_check_branch
          %369 = sbr.rel (%p367) target = $region36
        $region35: #{param_matmul.1} parent=27 // pred_region
          %s370 = smul.u32 4, %s21
          %s372 = ssub.s32 512, 512
          %373 = vsyncadd %s363, %s372
          %s374 = smul.addr %s370, 128
          %s375 = scalar_lea.hbm %s3, %s374
          %s377 = sshll.u32 %s366, 4
          %s378 = int_to_ptr.vmem [resolvable:$true] %s377
          %380 = dma.vmem_to_hbm [thread:$0]  %s378, 512, %s375, %s363
        $region36: #{param_matmul.1} parent=27 // pred_fallthru
          _
      $region28: #{param_matmul.1} parent=5 // pred_fallthru
        _
      %p381 = scmp.le.s32.totalorder 2, %s16
      // Predicated region
      $region37: #{param_matmul.1} parent=5 // pred_check
        %p382 = pneg %p381
      $region38: #{param_matmul.1} parent=5 // pred_check_branch
        %384 = sbr.rel (%p382) target = $region40
      $region39: #{param_matmul.1} parent=5 // pred_region
        %s385 = ssub.s32 %s16, 2
        // Predicated region
        $region41: #{param_matmul.1} parent=39 // pred_check
          %p386 = pneg %p99
        $region42: #{param_matmul.1} parent=39 // pred_check_branch
          %388 = sbr.rel (%p386) target = $region44
        $region43: #{param_matmul.1} parent=39 // pred_region
          %s389 = sand.u32 %s84, 1
          %s390 = scalar_lea.sflag [#allocation6], %s389
          %s391 = sand.u32 %s84, 1
          %s392 = smul.addr %s391, 32
          %s393 = scalar_lea.vmem [#allocation7], %s392
          %394 = dma.done %s390, 512
        $region44: #{param_matmul.1} parent=39 // pred_fallthru
          _
      $region40: #{param_matmul.1} parent=5 // pred_fallthru
        _
    $region6: #{param_matmul.1} parent=1 // loop_footer
      %s20 = sadd.s32 1, %s16
    $region7: #{param_matmul.1} parent=1 // loop_footer_branch
      %15 = sbr.rel target = $region3
    $region8: #{param_matmul.1} parent=1 // loop_exit
      _
    %395 = vsyncpa [#allocation5], 1
    %s396 = scalar_lea.sflag [#allocation5], 1
    %397 = vsyncpa %s396, 1
    %398 = vsyncpa [#allocation6], 1
    %s399 = scalar_lea.sflag [#allocation6], 1
    %400 = vsyncpa %s399, 1

</llo_original>
